<compile_context>
chip_gen: v7x
topology: tpu7x:2x2x1
jax: 0.10.0
libtpu: 0.0.40
codegen_flags: <defaults>
</compile_context>

<pallas_src>
import jax
import jax.numpy as jnp
from jax.experimental import pallas as pl
from jax.experimental.pallas import tpu as pltpu


def _round_up(x, m):
    return ((x + m - 1) // m) * m


def _sublane_multiple(dtype):
    return {4: 8, 2: 16, 1: 32}.get(jnp.dtype(dtype).itemsize, 8)


def _pick_lane_tile(padded_dim, cap):
    """Largest multiple-of-128 tile <= cap that divides padded_dim (a 128-multiple)."""
    if padded_dim <= cap:
        return padded_dim
    c = (cap // 128) * 128
    while c >= 128:
        if padded_dim % c == 0:
            return c
        c -= 128
    return 128


# ----------------------------------------------------------------------------
# Kernels
# ----------------------------------------------------------------------------
def _linear_kernel_multi_k(x_ref, w_ref, b_ref, o_ref, acc_ref):
    # x_ref: (tile_b, tile_k)  w_ref: (tile_k, tile_n)  b_ref: (1, tile_n) f32
    # o_ref: (tile_b, tile_n)  acc_ref: f32 scratch persistent across K axis.
    k = pl.program_id(2)

    @pl.when(k == 0)
    def _():
        # Seed the accumulator with the bias: drops the epilogue add.
        acc_ref[...] = jnp.broadcast_to(b_ref[...], acc_ref.shape)

    acc_ref[...] += jnp.dot(x_ref[...], w_ref[...],
                            preferred_element_type=jnp.float32)

    @pl.when(k == pl.num_programs(2) - 1)
    def _():
        o_ref[...] = acc_ref[...].astype(o_ref.dtype)


def _linear_kernel_single_k(x_ref, w_ref, b_ref, o_ref):
    # Whole reduction in one step: no accumulator scratch, no VMEM round trip.
    o_ref[...] = (jnp.dot(x_ref[...], w_ref[...],
                          preferred_element_type=jnp.float32)
                  + b_ref[...]).astype(o_ref.dtype)


# ----------------------------------------------------------------------------
# One-time weight preprocessing (hoisted out of the per-call path)
# ----------------------------------------------------------------------------
def prepare_expert_params(w, b, *, compute_dtype=None):
    """Preprocess PyTorch-layout weights once: transpose, pad, (optionally) cast.

    w: (out_features, in_features), b: (out_features,)
    Returns a dict usable by `expert_net_apply`.
    """
    OUT, IN = w.shape
    assert b.shape == (OUT,)
    IN_pad = _round_up(IN, 128)
    OUT_pad = _round_up(OUT, 128)

    w_t = jnp.transpose(w)  # (IN, OUT)
    if IN_pad != IN or OUT_pad != OUT:
        w_t = jnp.pad(w_t, ((0, IN_pad - IN), (0, OUT_pad - OUT)))
    if compute_dtype is not None:
        w_t = w_t.astype(compute_dtype)

    b_p = b.astype(jnp.float32)
    if OUT_pad != OUT:
        b_p = jnp.pad(b_p, (0, OUT_pad - OUT))

    return {
        "w": w_t,                          # (IN_pad, OUT_pad), compute dtype
        "b": b_p.reshape(1, OUT_pad),      # (1, OUT_pad), float32
        "in_features": IN,
        "out_features": OUT,
        "compute_dtype": compute_dtype,
    }


# ----------------------------------------------------------------------------
# Forward pass
# ----------------------------------------------------------------------------
def expert_net_apply(params, x, *, tile_b=None, tile_n=None, tile_k=None,
                     weight_buffers=None):
    """y = x @ W^T + b using the pre-processed params from prepare_expert_params."""
    w_p = params["w"]
    b2d = params["b"]
    IN = params["in_features"]
    OUT = params["out_features"]
    compute_dtype = params["compute_dtype"]
    IN_pad, OUT_pad = w_p.shape

    orig_shape = x.shape
    assert orig_shape[-1] == IN, "last dim of x must equal in_features"
    out_dtype = x.dtype
    x = x.reshape(-1, IN)
    B = x.shape[0]

    # ---- per-call x-side work: only what is strictly required ----
    if compute_dtype is not None and x.dtype != compute_dtype:
        x = x.astype(compute_dtype)
    sub = _sublane_multiple(x.dtype)
    B_eff = _round_up(B, sub)
    # K-dim zero pad is mandatory (padded K columns must contribute exactly 0);
    # the B pad only rounds up to the dtype sublane multiple (tiny / usually 0).
    if IN_pad != IN or B_eff != B:
        x = jnp.pad(x, ((0, B_eff - B), (0, IN_pad - IN)))

    # ---- tile selection ----
    if tile_b is None:
        tile_b = min(B_eff, 1024)          # cover all of B when it fits
    if tile_n is None:
        tile_n = _pick_lane_tile(OUT_pad, 1024)
    if tile_k is None:
        tile_k = _pick_lane_tile(IN_pad, 512)

    grid_b = pl.cdiv(B_eff, tile_b)
    grid_n = OUT_pad // tile_n
    grid_k = IN_pad // tile_k

    # Guarantee >= 2 parallel tiles so v7x's two TensorCores both get work.
    if grid_b * grid_n == 1:
        if tile_n % 256 == 0:
            tile_n //= 2
        elif tile_b % (2 * sub) == 0:
            tile_b //= 2
        grid_b = pl.cdiv(B_eff, tile_b)
        grid_n = OUT_pad // tile_n

    assert tile_b % sub == 0
    assert tile_n % 128 == 0 and OUT_pad % tile_n == 0
    assert tile_k % 128 == 0 and IN_pad % tile_k == 0

    # ---- scoped VMEM budget: what we need (+headroom), below physical cap ----
    est = (2 * tile_b * tile_k * jnp.dtype(x.dtype).itemsize        # x tile (2-buf)
           + 2 * tile_k * tile_n * jnp.dtype(w_p.dtype).itemsize    # w tile (2-buf)
           + 2 * tile_n * 4                                         # bias tile
           + 2 * tile_b * tile_n * jnp.dtype(out_dtype).itemsize    # out tile (2-buf)
           + (tile_b * tile_n * 4 if grid_k > 1 else 0))            # f32 acc scratch
    try:
        vmem_cap = int(pltpu.get_tpu_info().vmem_capacity_bytes)
    except Exception:
        vmem_cap = 64 * 1024 * 1024        # conservative fallback (v7x per-TC)
    budget = int(vmem_cap * 0.8)           # headroom for Mosaic internal scratch
    vmem_limit = min(budget, max(32 * 1024 * 1024, int(est * 1.5) + (8 << 20)))

    def _w_spec(index_map):
        if weight_buffers is not None and int(weight_buffers) != 2:
            return pl.BlockSpec((tile_k, tile_n), index_map,
                                pipeline_mode=pl.Buffered(int(weight_buffers)))
        return pl.BlockSpec((tile_k, tile_n), index_map)

    if grid_k == 1:
        grid = (grid_b, grid_n)
        kernel = _linear_kernel_single_k
        in_specs = [
            pl.BlockSpec((tile_b, tile_k), lambda i, j: (i, 0)),   # x
            _w_spec(lambda i, j: (0, j)),                          # W^T
            pl.BlockSpec((1, tile_n), lambda i, j: (0, j)),        # bias
        ]
        out_spec = pl.BlockSpec((tile_b, tile_n), lambda i, j: (i, j))
        scratch = []
        semantics = ("parallel", "parallel")
    else:
        grid = (grid_b, grid_n, grid_k)
        kernel = _linear_kernel_multi_k
        in_specs = [
            pl.BlockSpec((tile_b, tile_k), lambda i, j, k: (i, k)),  # x
            _w_spec(lambda i, j, k: (k, j)),                         # W^T
            pl.BlockSpec((1, tile_n), lambda i, j, k: (0, j)),       # bias
        ]
        out_spec = pl.BlockSpec((tile_b, tile_n), lambda i, j, k: (i, j))
        scratch = [pltpu.VMEM((tile_b, tile_n), jnp.float32)]
        semantics = ("parallel", "parallel", "arbitrary")

    y = pl.pallas_call(
        kernel,
        out_shape=jax.ShapeDtypeStruct((B_eff, OUT_pad), out_dtype),
        grid_spec=pltpu.PrefetchScalarGridSpec(
            num_scalar_prefetch=0,
            grid=grid,
            in_specs=in_specs,
            out_specs=out_spec,
            scratch_shapes=scratch,
        ),
        compiler_params=pltpu.CompilerParams(
            dimension_semantics=semantics,
            vmem_limit_bytes=vmem_limit,
        ),
    )(x, w_p, b2d)

    if B_eff != B or OUT_pad != OUT:
        y = y[:B, :OUT]
    return y.reshape(*orig_shape[:-1], OUT)


def expert_net_forward(x, w, b, *, compute_dtype=None, **kwargs):
    """Convenience one-shot wrapper (prefer prepare_expert_params + apply in loops)."""
    return expert_net_apply(prepare_expert_params(w, b, compute_dtype=compute_dtype),
                            x, **kwargs)


if __name__ == "__main__":
    # Small shapes consistent with Expert_net(input_shape, output_shape).
    batch, input_shape, output_shape = 8, 32, 64

    key = jax.random.PRNGKey(0)
    kx, kw, kb = jax.random.split(key, 3)

    x = jax.random.normal(kx, (batch, input_shape), dtype=jnp.float32)
    bound = 1.0 / (input_shape ** 0.5)  # PyTorch nn.Linear default init range
    w = jax.random.uniform(kw, (output_shape, input_shape), dtype=jnp.float32,
                           minval=-bound, maxval=bound)   # PyTorch (out, in) layout
    b = jax.random.uniform(kb, (output_shape,), dtype=jnp.float32,
                           minval=-bound, maxval=bound)

    y_ref = x @ w.T + b

    # f32 path with cached (pre-processed) weights: single-K kernel, no scratch.
    params = prepare_expert_params(w, b)
    y = jax.block_until_ready(expert_net_apply(params, x))
    assert y.shape == (batch, output_shape)
    assert jnp.allclose(y, y_ref, atol=1e-5, rtol=1e-5), "f32 mismatch vs reference"

    # bf16 MXU path (bf16 operands, f32 accumulation + f32 bias), weights cached once.
    params_bf16 = prepare_expert_params(w, b, compute_dtype=jnp.bfloat16)
    y_bf16 = jax.block_until_ready(expert_net_apply(params_bf16, x))
    assert y_bf16.shape == (batch, output_shape)
    assert jnp.allclose(y_bf16, y_ref, atol=1e-1, rtol=1e-1), "bf16 mismatch vs reference"

    # Larger shape exercising multi-K accumulation, N tiling and the
    # >=2-parallel-tile split.
    B2, IN2, OUT2 = 256, 640, 384
    k2x, k2w, k2b = jax.random.split(jax.random.PRNGKey(1), 3)
    x2 = jax.random.normal(k2x, (B2, IN2), dtype=jnp.float32)
    bound2 = 1.0 / (IN2 ** 0.5)
    w2 = jax.random.uniform(k2w, (OUT2, IN2), dtype=jnp.float32,
                            minval=-bound2, maxval=bound2)
    b2 = jax.random.uniform(k2b, (OUT2,), dtype=jnp.float32,
                            minval=-bound2, maxval=bound2)
    params2 = prepare_expert_params(w2, b2)
    y2 = jax.block_until_ready(expert_net_apply(params2, x2))
    y2_ref = x2 @ w2.T + b2
    assert y2.shape == (B2, OUT2)
    assert jnp.allclose(y2, y2_ref, atol=5e-2, rtol=5e-2), "tiled path mismatch"

    print("KERNEL_OK")
</pallas_src>

<mosaic_0001>
module attributes {stable_mosaic.version = 11 : i64} {
  func.func @_linear_kernel_single_k(%arg0: i32, %arg1: i32, %arg2: memref<8x128xf32, #tpu.memory_space<vmem>>, %arg3: memref<128x128xf32, #tpu.memory_space<vmem>>, %arg4: memref<1x128xf32, #tpu.memory_space<vmem>>, %arg5: memref<8x128xf32, #tpu.memory_space<vmem>>) attributes {dimension_semantics = [#tpu.dimension_semantics<parallel>, #tpu.dimension_semantics<parallel>], iteration_bounds = array<i64: 1, 1>, scalar_prefetch = 0 : i64, scratch_operands = 0 : i64, tpu.core_type = #tpu.core_type<tc>, window_params = [{transform_indices = @transform_0, window_bounds = array<i64: 8, 128>}, {transform_indices = @transform_1, window_bounds = array<i64: 128, 128>}, {transform_indices = @transform_2, window_bounds = array<i64: 1, 128>}, {transform_indices = @transform_3, window_bounds = array<i64: 8, 128>}]} {
    %c0 = arith.constant 0 : index
    %c0_0 = arith.constant 0 : index
    %0 = vector.load %arg2[%c0, %c0_0] : memref<8x128xf32, #tpu.memory_space<vmem>>, vector<8x128xf32>
    %c0_1 = arith.constant 0 : index
    %c0_2 = arith.constant 0 : index
    %1 = vector.load %arg3[%c0_1, %c0_2] : memref<128x128xf32, #tpu.memory_space<vmem>>, vector<128x128xf32>
    %cst = arith.constant dense<0.000000e+00> : vector<8x128xf32>
    %2 = tpu.matmul %0, %1, %cst {dimension_numbers = #tpu.dot_dimension_numbers<[1], [0], [0], [1], [0, 0, 1, 1], [], []>} : vector<8x128xf32>, vector<128x128xf32>, vector<8x128xf32> -> vector<8x128xf32>
    %c0_3 = arith.constant 0 : index
    %c0_4 = arith.constant 0 : index
    %3 = vector.load %arg4[%c0_3, %c0_4] : memref<1x128xf32, #tpu.memory_space<vmem>>, vector<1x128xf32>
    %4 = vector.broadcast %3 : vector<1x128xf32> to vector<8x128xf32>
    %5 = arith.addf %2, %4 : vector<8x128xf32>
    %c0_5 = arith.constant 0 : index
    %c0_6 = arith.constant 0 : index
    %6 = vector.load %arg5[%c0_5, %c0_6] : memref<8x128xf32, #tpu.memory_space<vmem>>, vector<8x128xf32>
    tpu.vector_store %arg5[%c0_5, %c0_6], %5 {strides = array<i32>} : memref<8x128xf32, #tpu.memory_space<vmem>>, vector<8x128xf32>,
    return
  }
  func.func @transform_0(%arg0: i32, %arg1: i32) -> (i32, i32) {
    %c0_i32 = arith.constant 0 : i32
    %c0_i32_0 = arith.constant 0 : i32
    return %arg0, %c0_i32 : i32, i32
  }
  func.func @transform_1(%arg0: i32, %arg1: i32) -> (i32, i32) {
    %c0_i32 = arith.constant 0 : i32
    %c0_i32_0 = arith.constant 0 : i32
    return %c0_i32, %arg1 : i32, i32
  }
  func.func @transform_2(%arg0: i32, %arg1: i32) -> (i32, i32) {
    %c0_i32 = arith.constant 0 : i32
    %c0_i32_0 = arith.constant 0 : i32
    return %c0_i32, %arg1 : i32, i32
  }
  func.func @transform_3(%arg0: i32, %arg1: i32) -> (i32, i32) {
    %c0_i32 = arith.constant 0 : i32
    return %arg0, %arg1 : i32, i32
  }
}

</mosaic_0001>

<llo_original>
// kernel: tpu_custom_call.1
$region0: #{tpu_custom_call.1}
  #allocation0 [shape = 'u32[]', space=smem, size = 0x4, offset = 0x4, fixed_abs, tag = 'smem constant byte address 0x4 - core index']
  #allocation1 [shape = 'u32[144,128]{1,0:T(1,128)}', space=vmem, size = 0x12000, scoped, tag = 'internal scratch']
  %s0 = inlined_call_operand.hbm [shape: f32[8,128], index: 0, kind: input, shape index: {}]
  %s1 = inlined_call_operand.hbm [shape: f32[128,128], index: 1, kind: input, shape index: {}]
  %s2 = inlined_call_operand.vmem [shape: f32[1,128], index: 2, kind: input, shape index: {}]
  %s3 = inlined_call_operand.hbm [shape: f32[8,128], index: 3, kind: output, shape index: {}]
  %s4 = sld [smem:[#allocation0]]
  $region30: #{tpu_custom_call.1} parent=0
    _
  %s6 = ssub.s32 1, %s4
  %s7 = scalar_select 0, %s6, %s4
  $region1: #{tpu_custom_call.1} parent=0
    #allocation2 [shape = 'u8[4096]{0}', space=vmem, size = 0x1000, scoped, tag = 'input window, operand 0, single buffered']
    #allocation3 [shape = 's32[1]{0}', space=sflag, size = 0x4, scoped, tag = 'scoped memory for tpu_custom_call.1']
    #allocation4 [shape = 's32[1]{0}', space=sflag, size = 0x4, scoped, tag = 'scoped memory for tpu_custom_call.1']
    #allocation5 [shape = 'u8[65536]{0}', space=vmem, size = 0x10000, scoped, tag = 'input window, operand 1, single buffered']
    #allocation6 [shape = 's32[1]{0}', space=sflag, size = 0x4, scoped, tag = 'scoped memory for tpu_custom_call.1']
    #allocation7 [shape = 'u8[4096]{0}', space=vmem, size = 0x1000, scoped, tag = 'output window, operand 0, single buffered']
    %8 = vsyncpa [#allocation3], 0
    %9 = vsyncpa [#allocation6], 0
    %10 = vsyncpa [#allocation4], 0
    // Predicated region
    $region2: #{tpu_custom_call.1} parent=1 // pred_check
      _
    $region3: #{tpu_custom_call.1} parent=1 // pred_check_branch
      %12 = sbr.rel (0) target = $region5
    $region4: #{tpu_custom_call.1} parent=1 // pred_region
      %s14 = ssub.s32 128, 128
      %15 = vsyncadd [#allocation3], %s14
      %s17 = sshll.u32 [#allocation2], 4
      %s18 = int_to_ptr.vmem [resolvable:$true] %s17
      %20 = dma.hbm_to_vmem [thread:$0]  %s0, 128, %s18, [#allocation3]
    $region5: #{tpu_custom_call.1} parent=1 // pred_fallthru
      _
    // Predicated region
    $region6: #{tpu_custom_call.1} parent=1 // pred_check
      _
    $region7: #{tpu_custom_call.1} parent=1 // pred_check_branch
      %22 = sbr.rel (0) target = $region9
    $region8: #{tpu_custom_call.1} parent=1 // pred_region
      %s24 = ssub.s32 2048, 2048
      %25 = vsyncadd [#allocation6], %s24
      %s26 = sshll.u32 [#allocation5], 4
      %s27 = int_to_ptr.vmem [resolvable:$true] %s26
      %32 = dma.hbm_to_vmem [thread:$0]  %s1, 2048, %s27, [#allocation6], 128, 128, 8
    $region9: #{tpu_custom_call.1} parent=1 // pred_fallthru
      _
    // Predicated region
    $region10: #{tpu_custom_call.1} parent=1 // pred_check
      _
    $region11: #{tpu_custom_call.1} parent=1 // pred_check_branch
      %34 = sbr.rel (0) target = $region13
    $region12: #{tpu_custom_call.1} parent=1 // pred_region
      _
    $region13: #{tpu_custom_call.1} parent=1 // pred_fallthru
      _
    // Predicated region
    $region14: #{tpu_custom_call.1} parent=1 // pred_check
      _
    $region15: #{tpu_custom_call.1} parent=1 // pred_check_branch
      %36 = sbr.rel (0) target = $region17
    $region16: #{tpu_custom_call.1} parent=1 // pred_region
      %37 = dma.done [#allocation3], 128
    $region17: #{tpu_custom_call.1} parent=1 // pred_fallthru
      _
    // Predicated region
    $region18: #{tpu_custom_call.1} parent=1 // pred_check
      _
    $region19: #{tpu_custom_call.1} parent=1 // pred_check_branch
      %39 = sbr.rel (0) target = $region21
    $region20: #{tpu_custom_call.1} parent=1 // pred_region
      %40 = dma.done [#allocation6], 2048
    $region21: #{tpu_custom_call.1} parent=1 // pred_fallthru
      _
    %v41 = vld [vmem:[#allocation2] sm:$0xff]
    %v42 = vld [vmem:[#allocation5] sm:$0xff]
    %v43 = vld [vmem:[#allocation5 + $0x8] sm:$0xff]
    %v44 = vld [vmem:[#allocation5 + $0x10] sm:$0xff]
    %v45 = vld [vmem:[#allocation5 + $0x18] sm:$0xff]
    %v46 = vld [vmem:[#allocation5 + $0x20] sm:$0xff]
    %v47 = vld [vmem:[#allocation5 + $0x28] sm:$0xff]
    %v48 = vld [vmem:[#allocation5 + $0x30] sm:$0xff]
    %v49 = vld [vmem:[#allocation5 + $0x38] sm:$0xff]
    %v50 = vld [vmem:[#allocation5 + $0x40] sm:$0xff]
    %v51 = vld [vmem:[#allocation5 + $0x48] sm:$0xff]
    %v52 = vld [vmem:[#allocation5 + $0x50] sm:$0xff]
    %v53 = vld [vmem:[#allocation5 + $0x58] sm:$0xff]
    %v54 = vld [vmem:[#allocation5 + $0x60] sm:$0xff]
    %v55 = vld [vmem:[#allocation5 + $0x68] sm:$0xff]
    %v56 = vld [vmem:[#allocation5 + $0x70] sm:$0xff]
    %v57 = vld [vmem:[#allocation5 + $0x78] sm:$0xff]
    %v58 = vld [vmem:[%s2] sm:$0x1]
    %v60 = vlaneseq
    %v61 = vshrl.u32 %v60, 7
    %v62 = vsub.s32 0, %v61
    %v63 = vrot.slane %v58, %v62
    %65 = vmatprep.subr.mxu0 0.0
    %66 = vmatpush1.msra.mxu0 %v42
    %67 = vmatprep.subr.mxu0 0.0
    %68 = vmatpush1.msra.mxu0 %v43
    %69 = vmatprep.subr.mxu0 0.0
    %70 = vmatpush1.msra.mxu0 %v44
    %71 = vmatprep.subr.mxu0 0.0
    %72 = vmatpush1.msra.mxu0 %v45
    %73 = vmatprep.subr.mxu0 0.0
    %74 = vmatpush1.msra.mxu0 %v46
    %75 = vmatprep.subr.mxu0 0.0
    %76 = vmatpush1.msra.mxu0 %v47
    %77 = vmatprep.subr.mxu0 0.0
    %78 = vmatpush1.msra.mxu0 %v48
    %79 = vmatprep.subr.mxu0 0.0
    %80 = vmatpush1.msra.mxu0 %v49
    %81 = vmatprep.subr.mxu0 0.0
    %82 = vmatpush1.msra.mxu0 %v50
    %83 = vmatprep.subr.mxu0 0.0
    %84 = vmatpush1.msra.mxu0 %v51
    %85 = vmatprep.subr.mxu0 0.0
    %86 = vmatpush1.msra.mxu0 %v52
    %87 = vmatprep.subr.mxu0 0.0
    %88 = vmatpush1.msra.mxu0 %v53
    %89 = vmatprep.subr.mxu0 0.0
    %90 = vmatpush1.msra.mxu0 %v54
    %91 = vmatprep.subr.mxu0 0.0
    %92 = vmatpush1.msra.mxu0 %v55
    %93 = vmatprep.subr.mxu0 0.0
    %94 = vmatpush1.msra.mxu0 %v56
    %95 = vmatprep.subr.mxu0 0.0
    %96 = vmatpush1.msra.mxu0 %v57
    %97 = vmatprep.subr.mxu0 0.0
    %98 = vmatpush1.msra.mxu0 0.0
    %99 = vmatprep.subr.mxu0 0.0
    %100 = vmatpush1.msra.mxu0 0.0
    %101 = vmatprep.subr.mxu0 0.0
    %102 = vmatpush1.msra.mxu0 0.0
    %103 = vmatprep.subr.mxu0 0.0
    %104 = vmatpush1.msra.mxu0 0.0
    %105 = vmatprep.subr.mxu0 0.0
    %106 = vmatpush1.msra.mxu0 0.0
    %107 = vmatprep.subr.mxu0 0.0
    %108 = vmatpush1.msra.mxu0 0.0
    %109 = vmatprep.subr.mxu0 0.0
    %110 = vmatpush1.msra.mxu0 0.0
    %111 = vmatprep.subr.mxu0 0.0
    %112 = vmatpush1.msra.mxu0 0.0
    %113 = vmatprep.subr.mxu0 0.0
    %114 = vmatpush1.msra.mxu0 0.0
    %115 = vmatprep.subr.mxu0 0.0
    %116 = vmatpush1.msra.mxu0 0.0
    %117 = vmatprep.subr.mxu0 0.0
    %118 = vmatpush1.msra.mxu0 0.0
    %119 = vmatprep.subr.mxu0 0.0
    %120 = vmatpush1.msra.mxu0 0.0
    %121 = vmatprep.subr.mxu0 0.0
    %122 = vmatpush1.msra.mxu0 0.0
    %123 = vmatprep.subr.mxu0 0.0
    %124 = vmatpush1.msra.mxu0 0.0
    %125 = vmatprep.subr.mxu0 0.0
    %126 = vmatpush1.msra.mxu0 0.0
    %127 = vmatprep.subr.mxu0 0.0
    %128 = vmatpush1.msra.mxu0 0.0
    %129 = vmatprep.mubr.f32.mxu0 0.0
    %130 = vmatmul.mubr.f32.gmra.mrb[0].mxu0 %v41
    %v131 = vpop.f32.mrb[0].mxu0
    %v132 = vadd.f32 %v63, %v131
    %v133 = vpop.f32.mrb[0].mxu0
    %134 = vdwg.mxu0
    %135 = vst [vmem:[#allocation7] sm:$0xff] %v132
    // Predicated region
    $region22: #{tpu_custom_call.1} parent=1 // pred_check
      _
    $region23: #{tpu_custom_call.1} parent=1 // pred_check_branch
      %137 = sbr.rel (0) target = $region25
    $region24: #{tpu_custom_call.1} parent=1 // pred_region
      %s139 = ssub.s32 128, 128
      %140 = vsyncadd [#allocation4], %s139
      %s142 = sshll.u32 [#allocation7], 4
      %s143 = int_to_ptr.vmem [resolvable:$true] %s142
      %145 = dma.vmem_to_hbm [thread:$0]  %s143, 128, %s3, [#allocation4]
    $region25: #{tpu_custom_call.1} parent=1 // pred_fallthru
      _
    // Predicated region
    $region26: #{tpu_custom_call.1} parent=1 // pred_check
      _
    $region27: #{tpu_custom_call.1} parent=1 // pred_check_branch
      %147 = sbr.rel (0) target = $region29
    $region28: #{tpu_custom_call.1} parent=1 // pred_region
      %148 = dma.done [#allocation4], 128
    $region29: #{tpu_custom_call.1} parent=1 // pred_fallthru
      _
    %149 = vsyncpa [#allocation3], 1
    %150 = vsyncpa [#allocation6], 1
    %151 = vsyncpa [#allocation4], 1

</llo_original>
